<compile_context>
chip_gen: v7x
topology: tpu7x:2x2x1
jax: 0.10.0
libtpu: 0.0.40
codegen_flags: <defaults>
</compile_context>

<pallas_src>
import functools

import jax
import jax.numpy as jnp
from jax.experimental import pallas as pl
from jax.experimental.pallas import tpu as pltpu


def _round_up(x, m):
    return ((x + m - 1) // m) * m


def _resize_bilinear_align_corners(x, out_hw):
    """Pure-JAX bilinear resize matching F.interpolate(..., mode='bilinear', align_corners=True)."""
    # TODO(synk): the bilinear upsample stays in XLA (gather-heavy; no clean Pallas tile pattern).
    N, C, H, W = x.shape
    h, w = out_hw
    if (H, W) == (h, w):
        return x

    def coords(out_size, in_size):
        if out_size == 1:
            return jnp.zeros((1,), jnp.float32)
        return jnp.linspace(0.0, in_size - 1.0, out_size, dtype=jnp.float32)

    ys = coords(h, H)
    xs = coords(w, W)
    y0 = jnp.floor(ys).astype(jnp.int32)
    x0 = jnp.floor(xs).astype(jnp.int32)
    y1 = jnp.minimum(y0 + 1, H - 1)
    x1 = jnp.minimum(x0 + 1, W - 1)
    wy = (ys - y0.astype(jnp.float32))[None, None, :, None]   # [1,1,h,1]
    wx = (xs - x0.astype(jnp.float32))[None, None, None, :]   # [1,1,1,w]

    xf = x.astype(jnp.float32)
    rows = xf[:, :, y0, :] * (1.0 - wy) + xf[:, :, y1, :] * wy     # [N,C,h,W]
    out = rows[:, :, :, x0] * (1.0 - wx) + rows[:, :, :, x1] * wx  # [N,C,h,w]
    return out.astype(x.dtype)


def _dual_head_ce_kernel(s0_ref, s1_ref, t_ref, out_ref, *, w0, w1):
    """Per-pixel weighted CE for two heads on one [C, tile_p] pixel tile."""
    t = t_ref[...].astype(jnp.int32)                                    # [1, TP]

    def head_ce(s_ref):
        s = s_ref[...].astype(jnp.float32)                              # [C, TP]
        m = jnp.max(s, axis=0, keepdims=True)                           # [1, TP]
        z = s - m
        lse = jnp.log(jnp.sum(jnp.exp(z), axis=0, keepdims=True))       # [1, TP]
        cls = jax.lax.broadcasted_iota(jnp.int32, z.shape, 0)           # [C, TP]
        z_tgt = jnp.sum(jnp.where(cls == t, z, 0.0), axis=0, keepdims=True)
        return lse - z_tgt                                              # -log softmax[target]

    out_ref[...] = (w0 * head_ce(s0_ref) + w1 * head_ce(s1_ref)).astype(out_ref.dtype)


def cross_entropy_forward(scores, target, *, hr_weights=(0.4, 1.0), tile_p=8192):
    """Pallas forward of the PyTorch CrossEntropy module (2 heads, reduction='none')."""
    # TODO(synk): optional per-class `weight` vector (constructor arg, default None) not supported.
    assert len(hr_weights) == len(scores)
    score0, score1 = scores
    N, C = score0.shape[0], score0.shape[1]
    assert score1.shape[0] == N and score1.shape[1] == C
    h, w = int(target.shape[1]), int(target.shape[2])

    # Match F.interpolate(..., align_corners=True) when a head's resolution differs.
    score0 = _resize_bilinear_align_corners(score0, (h, w))
    score1 = _resize_bilinear_align_corners(score1, (h, w))

    P = h * w
    s0 = score0.reshape(N, C, P)                 # contiguous reshape: no extra HBM pass
    s1 = score1.reshape(N, C, P)
    tgt = target.reshape(N, 1, P).astype(jnp.int32)

    tp = min(tile_p, _round_up(P, 128))          # lane-aligned pixel tile
    grid = (N, pl.cdiv(P, tp))

    kernel = functools.partial(
        _dual_head_ce_kernel, w0=float(hr_weights[0]), w1=float(hr_weights[1])
    )

    out = pl.pallas_call(
        kernel,
        out_shape=jax.ShapeDtypeStruct((N, 1, P), jnp.float32),
        grid_spec=pltpu.PrefetchScalarGridSpec(
            num_scalar_prefetch=0,
            grid=grid,
            in_specs=[
                pl.BlockSpec((None, C, tp), lambda n, i: (n, 0, i)),
                pl.BlockSpec((None, C, tp), lambda n, i: (n, 0, i)),
                pl.BlockSpec((None, 1, tp), lambda n, i: (n, 0, i)),
            ],
            out_specs=pl.BlockSpec((None, 1, tp), lambda n, i: (n, 0, i)),
        ),
        compiler_params=pltpu.CompilerParams(
            dimension_semantics=("parallel", "parallel"),
            vmem_limit_bytes=32 * 1024 * 1024,
        ),
    )(s0, s1, tgt)

    return out.reshape(N, h, w)


def _reference(scores, target, hr_weights=(0.4, 1.0)):
    """Pure-JAX reference mirroring the PyTorch forward."""
    h, w = int(target.shape[1]), int(target.shape[2])
    t = target.astype(jnp.int32)

    def head(score):
        score = _resize_bilinear_align_corners(score, (h, w))
        logp = jax.nn.log_softmax(score.astype(jnp.float32), axis=1)     # [N,C,h,w]
        return -jnp.take_along_axis(logp, t[:, None, :, :], axis=1)[:, 0]

    return hr_weights[0] * head(scores[0]) + hr_weights[1] * head(scores[1])


if __name__ == "__main__":
    key = jax.random.PRNGKey(0)
    k0, k1, k2 = jax.random.split(key, 3)

    N, C, H, W = 2, 9, 16, 16
    # Two heads, HRNet-style: aux head at half resolution (exercises the resize path),
    # main head at full target resolution.
    score0 = jax.random.normal(k0, (N, C, H // 2, W // 2), dtype=jnp.float32)
    score1 = jax.random.normal(k1, (N, C, H, W), dtype=jnp.float32)
    target = jax.random.randint(k2, (N, H, W), 0, C, dtype=jnp.int32)

    out = cross_entropy_forward((score0, score1), target)
    out = jax.block_until_ready(out)

    ref = _reference((score0, score1), target)
    assert out.shape == (N, H, W), out.shape
    assert jnp.allclose(out, ref, rtol=1e-5, atol=1e-5), float(jnp.max(jnp.abs(out - ref)))
    print("KERNEL_OK")
</pallas_src>

<mosaic_0001>
module attributes {stable_mosaic.version = 11 : i64} {
  func.func @_dual_head_ce_kernel(%arg0: i32, %arg1: i32, %arg2: memref<1x9x256xf32, #tpu.memory_space<vmem>>, %arg3: memref<1x9x256xf32, #tpu.memory_space<vmem>>, %arg4: memref<1x1x256xi32, #tpu.memory_space<vmem>>, %arg5: memref<1x1x256xf32, #tpu.memory_space<vmem>>) attributes {dimension_semantics = [#tpu.dimension_semantics<parallel>, #tpu.dimension_semantics<parallel>], iteration_bounds = array<i64: 2, 1>, scalar_prefetch = 0 : i64, scratch_operands = 0 : i64, tpu.core_type = #tpu.core_type<tc>, window_params = [{transform_indices = @transform_0, window_bounds = array<i64: 1, 9, 256>}, {transform_indices = @transform_1, window_bounds = array<i64: 1, 9, 256>}, {transform_indices = @transform_2, window_bounds = array<i64: 1, 1, 256>}, {transform_indices = @transform_3, window_bounds = array<i64: 1, 1, 256>}]} {
    %c0 = arith.constant 0 : index
    %c0_0 = arith.constant 0 : index
    %c0_1 = arith.constant 0 : index
    %0 = vector.load %arg4[%c0, %c0_0, %c0_1] : memref<1x1x256xi32, #tpu.memory_space<vmem>>, vector<1x1x256xi32>
    %1 = vector.shape_cast %0 : vector<1x1x256xi32> to vector<1x256xi32>
    %c0_2 = arith.constant 0 : index
    %c0_3 = arith.constant 0 : index
    %c0_4 = arith.constant 0 : index
    %2 = vector.load %arg2[%c0_2, %c0_3, %c0_4] : memref<1x9x256xf32, #tpu.memory_space<vmem>>, vector<1x9x256xf32>
    %3 = vector.shape_cast %2 : vector<1x9x256xf32> to vector<9x256xf32>
    %cst = arith.constant dense<0xFF800000> : vector<256xf32>
    %4 = vector.multi_reduction <maximumf>, %3, %cst [0] : vector<9x256xf32> to vector<256xf32>
    %5 = vector.shape_cast %4 : vector<256xf32> to vector<1x256xf32>
    %6 = vector.broadcast %5 : vector<1x256xf32> to vector<9x256xf32>
    %7 = arith.subf %3, %6 : vector<9x256xf32>
    %8 = math.exp %7 : vector<9x256xf32>
    %cst_5 = arith.constant dense<0.000000e+00> : vector<256xf32>
    %9 = vector.multi_reduction <add>, %8, %cst_5 [0] : vector<9x256xf32> to vector<256xf32>
    %10 = vector.shape_cast %9 : vector<256xf32> to vector<1x256xf32>
    %11 = math.log %10 : vector<1x256xf32>
    %12 = tpu.iota {dimensions = array<i32: 0>} : vector<9x256xi32>
    %13 = vector.broadcast %1 : vector<1x256xi32> to vector<9x256xi32>
    %14 = arith.cmpi eq, %12, %13 : vector<9x256xi32>
    %cst_6 = arith.constant 0.000000e+00 : f32
    %15 = vector.broadcast %cst_6 : f32 to vector<9x256xf32>
    %16 = arith.select %14, %7, %15 : vector<9x256xi1>, vector<9x256xf32>
    %cst_7 = arith.constant dense<0.000000e+00> : vector<256xf32>
    %17 = vector.multi_reduction <add>, %16, %cst_7 [0] : vector<9x256xf32> to vector<256xf32>
    %18 = vector.shape_cast %17 : vector<256xf32> to vector<1x256xf32>
    %19 = arith.subf %11, %18 : vector<1x256xf32>
    %cst_8 = arith.constant 4.000000e-01 : f32
    %20 = vector.broadcast %cst_8 : f32 to vector<1x256xf32>
    %21 = arith.mulf %20, %19 : vector<1x256xf32>
    %c0_9 = arith.constant 0 : index
    %c0_10 = arith.constant 0 : index
    %c0_11 = arith.constant 0 : index
    %22 = vector.load %arg3[%c0_9, %c0_10, %c0_11] : memref<1x9x256xf32, #tpu.memory_space<vmem>>, vector<1x9x256xf32>
    %23 = vector.shape_cast %22 : vector<1x9x256xf32> to vector<9x256xf32>
    %cst_12 = arith.constant dense<0xFF800000> : vector<256xf32>
    %24 = vector.multi_reduction <maximumf>, %23, %cst_12 [0] : vector<9x256xf32> to vector<256xf32>
    %25 = vector.shape_cast %24 : vector<256xf32> to vector<1x256xf32>
    %26 = vector.broadcast %25 : vector<1x256xf32> to vector<9x256xf32>
    %27 = arith.subf %23, %26 : vector<9x256xf32>
    %28 = math.exp %27 : vector<9x256xf32>
    %cst_13 = arith.constant dense<0.000000e+00> : vector<256xf32>
    %29 = vector.multi_reduction <add>, %28, %cst_13 [0] : vector<9x256xf32> to vector<256xf32>
    %30 = vector.shape_cast %29 : vector<256xf32> to vector<1x256xf32>
    %31 = math.log %30 : vector<1x256xf32>
    %32 = tpu.iota {dimensions = array<i32: 0>} : vector<9x256xi32>
    %33 = vector.broadcast %1 : vector<1x256xi32> to vector<9x256xi32>
    %34 = arith.cmpi eq, %32, %33 : vector<9x256xi32>
    %cst_14 = arith.constant 0.000000e+00 : f32
    %35 = vector.broadcast %cst_14 : f32 to vector<9x256xf32>
    %36 = arith.select %34, %27, %35 : vector<9x256xi1>, vector<9x256xf32>
    %cst_15 = arith.constant dense<0.000000e+00> : vector<256xf32>
    %37 = vector.multi_reduction <add>, %36, %cst_15 [0] : vector<9x256xf32> to vector<256xf32>
    %38 = vector.shape_cast %37 : vector<256xf32> to vector<1x256xf32>
    %39 = arith.subf %31, %38 : vector<1x256xf32>
    %cst_16 = arith.constant 1.000000e+00 : f32
    %40 = vector.broadcast %cst_16 : f32 to vector<1x256xf32>
    %41 = arith.mulf %40, %39 : vector<1x256xf32>
    %42 = arith.addf %21, %41 : vector<1x256xf32>
    %c0_17 = arith.constant 0 : index
    %c0_18 = arith.constant 0 : index
    %c0_19 = arith.constant 0 : index
    %43 = vector.load %arg5[%c0_17, %c0_18, %c0_19] : memref<1x1x256xf32, #tpu.memory_space<vmem>>, vector<1x1x256xf32>
    %44 = vector.shape_cast %43 : vector<1x1x256xf32> to vector<1x256xf32>
    %45 = vector.shape_cast %42 : vector<1x256xf32> to vector<1x1x256xf32>
    tpu.vector_store %arg5[%c0_17, %c0_18, %c0_19], %45 {strides = array<i32>} : memref<1x1x256xf32, #tpu.memory_space<vmem>>, vector<1x1x256xf32>,
    return
  }
  func.func @transform_0(%arg0: i32, %arg1: i32) -> (i32, i32, i32) {
    %c0_i32 = arith.constant 0 : i32
    %c0_i32_0 = arith.constant 0 : i32
    return %arg0, %c0_i32, %arg1 : i32, i32, i32
  }
  func.func @transform_1(%arg0: i32, %arg1: i32) -> (i32, i32, i32) {
    %c0_i32 = arith.constant 0 : i32
    %c0_i32_0 = arith.constant 0 : i32
    return %arg0, %c0_i32, %arg1 : i32, i32, i32
  }
  func.func @transform_2(%arg0: i32, %arg1: i32) -> (i32, i32, i32) {
    %c0_i32 = arith.constant 0 : i32
    %c0_i32_0 = arith.constant 0 : i32
    return %arg0, %c0_i32, %arg1 : i32, i32, i32
  }
  func.func @transform_3(%arg0: i32, %arg1: i32) -> (i32, i32, i32) {
    %c0_i32 = arith.constant 0 : i32
    %c0_i32_0 = arith.constant 0 : i32
    return %arg0, %c0_i32, %arg1 : i32, i32, i32
  }
}

</mosaic_0001>

<llo_original>
// kernel: tpu_custom_call.1
$region0: #{tpu_custom_call.1}
  #allocation0 [shape = 'u32[]', space=smem, size = 0x4, offset = 0x4, fixed_abs, tag = 'smem constant byte address 0x4 - core index']
  #allocation1 [shape = 'u32[144,128]{1,0:T(1,128)}', space=vmem, size = 0x12000, scoped, tag = 'internal scratch']
  %s0 = inlined_call_operand.vmem [shape: f32[2,9,256], index: 0, kind: input, shape index: {}]
  %s1 = inlined_call_operand.vmem [shape: f32[2,9,256], index: 1, kind: input, shape index: {}]
  %s2 = inlined_call_operand.vmem [shape: s32[2,1,256], index: 2, kind: input, shape index: {}]
  %s3 = inlined_call_operand.hbm [shape: f32[2,1,256], index: 3, kind: output, shape index: {}]
  %s4 = sld [smem:[#allocation0]]
  $region45: #{tpu_custom_call.1} parent=0
    _
  %s6 = ssub.s32 1, %s4
  %s7 = scalar_select 0, %s6, %s4
  $region1: #{tpu_custom_call.1} parent=0
    #allocation2 [shape = 'u8[2048]{0}', space=vmem, size = 0x800, scoped, tag = 'output window, operand 0']
    #allocation3 [shape = 's32[2]{0}', space=sflag, size = 0x8, scoped, tag = 'scoped memory for tpu_custom_call.1']
    %8 = vsyncpa [#allocation3], 0
    %s9 = scalar_lea.sflag [#allocation3], 1
    %10 = vsyncpa %s9, 0
    loop: start=0, step=1, limit=4
    $region2: #{tpu_custom_call.1} parent=1 // loop_pre_header
      _
    $region3: #{tpu_custom_call.1} parent=1 // loop_header
      %s12 = sphi 0, %s16
      %p13 = scmp.ge.s32.totalorder %s12, 4
      %s19 = sphi 0, %s31
      %s20 = sphi 0, %s27
      %s21 = sphi 0, %s19
      %s22 = sphi 0, %s20
      %s23 = sphi 0, %s21
      %s24 = sphi 0, %s22
      %s36 = sphi 0, %s38
      %s39 = sphi 0, %s36
      %s40 = sphi 0, %s39
      %s56 = sphi 0, %s40
      %s64 = sphi 0, %s66
      %s67 = sphi 0, %s64
      %s68 = sphi 0, %s67
      %s84 = sphi 0, %s68
      %s92 = sphi 0, %s94
      %s95 = sphi 0, %s92
      %s96 = sphi 0, %s95
      %s112 = sphi 0, %s96
      %s120 = sphi 0, %s122
      %s123 = sphi 0, %s120
      %s124 = sphi 0, %s123
      %s140 = sphi 0, %s124
    $region4: #{tpu_custom_call.1} parent=1 // loop_header_branch
      %15 = sbr.rel (%p13) target = $region8
    $region5: #{tpu_custom_call.1} parent=1 // loop_body
      %s17 = ssub.s32 %s12, 1
      %s18 = ssub.s32 %s12, 2
      %s25 = sadd.s32 1, %s20
      %p26 = scmp.ge.s32.totalorder %s25, 1
      %s27 = scalar_select %p26, 0, %s25
      %s28 = sadd.s32 1, %s19
      %s29 = scalar_select %p26, %s28, %s19
      %p30 = scmp.ge.s32.totalorder %s29, 2
      %s31 = scalar_select %p30, 0, %s29
      %s32 = ssub.s32 %s19, %s31
      %s33 = ssub.s32 %s20, %s27
      %s34 = sor.u32 %s32, %s33
      %p35 = scmp.eq.s32.totalorder %s34, 0
      %s37 = sadd.s32 %s36, 1
      %s38 = scalar_select %p35, %s36, %s37
      %p41 = pneg %p35
      %p42 = scmp.eq.s32.totalorder %s12, 1
      %p43 = por %p41, %p42
      %p44 = scmp.ne.s32.totalorder %s36, %s39
      %p45 = scmp.eq.s32.totalorder %s12, 0
      %p46 = por %p44, %p45
      %p47 = scmp.ne.s32.totalorder %s36, %s39
      %p48 = scmp.eq.s32.totalorder %s17, 1
      %p49 = por %p47, %p48
      %p50 = scmp.ne.s32.totalorder %s39, %s40
      %p51 = scmp.eq.s32.totalorder %s17, 0
      %p52 = por %p50, %p51
      %p53 = scmp.ne.s32.totalorder %s39, %s40
      %p54 = scmp.eq.s32.totalorder %s18, 1
      %p55 = por %p53, %p54
      %p57 = scmp.ne.s32.totalorder %s40, %s56
      %p58 = scmp.eq.s32.totalorder %s18, 0
      %p59 = por %p57, %p58
      %s60 = ssub.s32 %s19, %s31
      %s61 = ssub.s32 %s20, %s27
      %s62 = sor.u32 %s60, %s61
      %p63 = scmp.eq.s32.totalorder %s62, 0
      %s65 = sadd.s32 %s64, 1
      %s66 = scalar_select %p63, %s64, %s65
      %p69 = pneg %p63
      %p70 = scmp.eq.s32.totalorder %s12, 1
      %p71 = por %p69, %p70
      %p72 = scmp.ne.s32.totalorder %s64, %s67
      %p73 = scmp.eq.s32.totalorder %s12, 0
      %p74 = por %p72, %p73
      %p75 = scmp.ne.s32.totalorder %s64, %s67
      %p76 = scmp.eq.s32.totalorder %s17, 1
      %p77 = por %p75, %p76
      %p78 = scmp.ne.s32.totalorder %s67, %s68
      %p79 = scmp.eq.s32.totalorder %s17, 0
      %p80 = por %p78, %p79
      %p81 = scmp.ne.s32.totalorder %s67, %s68
      %p82 = scmp.eq.s32.totalorder %s18, 1
      %p83 = por %p81, %p82
      %p85 = scmp.ne.s32.totalorder %s68, %s84
      %p86 = scmp.eq.s32.totalorder %s18, 0
      %p87 = por %p85, %p86
      %s88 = ssub.s32 %s19, %s31
      %s89 = ssub.s32 %s20, %s27
      %s90 = sor.u32 %s88, %s89
      %p91 = scmp.eq.s32.totalorder %s90, 0
      %s93 = sadd.s32 %s92, 1
      %s94 = scalar_select %p91, %s92, %s93
      %p97 = pneg %p91
      %p98 = scmp.eq.s32.totalorder %s12, 1
      %p99 = por %p97, %p98
      %p100 = scmp.ne.s32.totalorder %s92, %s95
      %p101 = scmp.eq.s32.totalorder %s12, 0
      %p102 = por %p100, %p101
      %p103 = scmp.ne.s32.totalorder %s92, %s95
      %p104 = scmp.eq.s32.totalorder %s17, 1
      %p105 = por %p103, %p104
      %p106 = scmp.ne.s32.totalorder %s95, %s96
      %p107 = scmp.eq.s32.totalorder %s17, 0
      %p108 = por %p106, %p107
      %p109 = scmp.ne.s32.totalorder %s95, %s96
      %p110 = scmp.eq.s32.totalorder %s18, 1
      %p111 = por %p109, %p110
      %p113 = scmp.ne.s32.totalorder %s96, %s112
      %p114 = scmp.eq.s32.totalorder %s18, 0
      %p115 = por %p113, %p114
      %s116 = ssub.s32 %s19, %s31
      %s117 = ssub.s32 %s20, %s27
      %s118 = sor.u32 %s116, %s117
      %p119 = scmp.eq.s32.totalorder %s118, 0
      %s121 = sadd.s32 %s120, 1
      %s122 = scalar_select %p119, %s120, %s121
      %p125 = pneg %p119
      %p126 = scmp.eq.s32.totalorder %s12, 1
      %p127 = por %p125, %p126
      %p128 = scmp.ne.s32.totalorder %s120, %s123
      %p129 = scmp.eq.s32.totalorder %s12, 0
      %p130 = por %p128, %p129
      %p131 = scmp.ne.s32.totalorder %s120, %s123
      %p132 = scmp.eq.s32.totalorder %s17, 1
      %p133 = por %p131, %p132
      %p134 = scmp.ne.s32.totalorder %s123, %s124
      %p135 = scmp.eq.s32.totalorder %s17, 0
      %p136 = por %p134, %p135
      %p137 = scmp.ne.s32.totalorder %s123, %s124
      %p138 = scmp.eq.s32.totalorder %s18, 1
      %p139 = por %p137, %p138
      %p141 = scmp.ne.s32.totalorder %s124, %s140
      %p142 = scmp.eq.s32.totalorder %s18, 0
      %p143 = por %p141, %p142
      %p144 = scmp.le.s32.totalorder 1, %s12
      %p145 = scmp.lt.s32.totalorder %s12, 3
      %p146 = pnand %p144, %p145
      %p147 = pneg %p146
      // Predicated region
      $region9: #{tpu_custom_call.1} parent=5 // pred_check
        _
      $region10: #{tpu_custom_call.1} parent=5 // pred_check_branch
        %149 = sbr.rel (%p146) target = $region12
      $region11: #{tpu_custom_call.1} parent=5 // pred_region
        %s150 = ssub.s32 %s12, 1
      $region12: #{tpu_custom_call.1} parent=5 // pred_fallthru
        _
      %p151 = scmp.lt.s32.totalorder %s12, 2
      // Predicated region
      $region13: #{tpu_custom_call.1} parent=5 // pred_check
        %p152 = pneg %p151
      $region14: #{tpu_custom_call.1} parent=5 // pred_check_branch
        %154 = sbr.rel (%p152) target = $region16
      $region15: #{tpu_custom_call.1} parent=5 // pred_region
        // Predicated region
        $region17: #{tpu_custom_call.1} parent=15 // pred_check
          %p155 = pneg %p46
        $region18: #{tpu_custom_call.1} parent=15 // pred_check_branch
          %157 = sbr.rel (%p155) target = $region20
        $region19: #{tpu_custom_call.1} parent=15 // pred_region
          %s158 = smul.u32 2, %s20
          %p159 = scmp.lt.s32.totalorder %s19, 1
          %s160 = scalar_select %p159, %s19, 1
          %p161 = scmp.lt.s32.totalorder %s158, 1
          %s162 = scalar_select %p161, %s158, 1
          %s163 = smul.addr %s160, 4
          %s164 = sadd.s32 %s162, %s163
          %s165 = smul.addr %s164, 8
          %s166 = scalar_lea.vmem %s0, %s165
          %s167 = smul.u32 2, %s20
        $region20: #{tpu_custom_call.1} parent=15 // pred_fallthru
          _
        // Predicated region
        $region21: #{tpu_custom_call.1} parent=15 // pred_check
          %p168 = pneg %p74
        $region22: #{tpu_custom_call.1} parent=15 // pred_check_branch
          %170 = sbr.rel (%p168) target = $region24
        $region23: #{tpu_custom_call.1} parent=15 // pred_region
          %s171 = smul.u32 2, %s20
          %p172 = scmp.lt.s32.totalorder %s19, 1
          %s173 = scalar_select %p172, %s19, 1
          %p174 = scmp.lt.s32.totalorder %s171, 1
          %s175 = scalar_select %p174, %s171, 1
          %s176 = smul.addr %s173, 4
          %s177 = sadd.s32 %s175, %s176
          %s178 = smul.addr %s177, 8
          %s179 = scalar_lea.vmem %s1, %s178
          %s180 = smul.u32 2, %s20
        $region24: #{tpu_custom_call.1} parent=15 // pred_fallthru
          _
        // Predicated region
        $region25: #{tpu_custom_call.1} parent=15 // pred_check
          %p181 = pneg %p102
        $region26: #{tpu_custom_call.1} parent=15 // pred_check_branch
          %183 = sbr.rel (%p181) target = $region28
        $region27: #{tpu_custom_call.1} parent=15 // pred_region
          %s184 = smul.u32 2, %s20
          %p185 = scmp.lt.s32.totalorder %s19, 1
          %s186 = scalar_select %p185, %s19, 1
          %p187 = scmp.lt.s32.totalorder %s184, 1
          %s188 = scalar_select %p187, %s184, 1
          %s189 = smul.addr %s186, 2
          %s190 = sadd.s32 %s188, %s189
          %s191 = scalar_lea.vmem %s2, %s190
          %s192 = smul.u32 2, %s20
        $region28: #{tpu_custom_call.1} parent=15 // pred_fallthru
          _
      $region16: #{tpu_custom_call.1} parent=5 // pred_fallthru
        _
      %p193 = scmp.le.s32.totalorder 1, %s12
      %p194 = scmp.lt.s32.totalorder %s12, 3
      %p195 = pnand %p193, %p194
      %p196 = pneg %p195
      // Predicated region
      $region29: #{tpu_custom_call.1} parent=5 // pred_check
        _
      $region30: #{tpu_custom_call.1} parent=5 // pred_check_branch
        %198 = sbr.rel (%p195) target = $region32
      $region31: #{tpu_custom_call.1} parent=5 // pred_region
        %s199 = ssub.s32 %s12, 1
        %s200 = smul.u32 2, %s22
        %p201 = scmp.lt.s32.totalorder %s21, 1
        %s202 = scalar_select %p201, %s21, 1
        %p203 = scmp.lt.s32.totalorder %s200, 1
        %s204 = scalar_select %p203, %s200, 1
        %s205 = smul.addr %s202, 4
        %s206 = sadd.s32 %s204, %s205
        %s207 = smul.addr %s206, 8
        %s208 = scalar_lea.vmem %s0, %s207
        %p209 = pneg %p52
        %p210 = pneg %p49
        %s211 = smul.u32 2, %s22
        %p212 = scmp.lt.s32.totalorder %s21, 1
        %s213 = scalar_select %p212, %s21, 1
        %p214 = scmp.lt.s32.totalorder %s211, 1
        %s215 = scalar_select %p214, %s211, 1
        %s216 = smul.addr %s213, 4
        %s217 = sadd.s32 %s215, %s216
        %s218 = smul.addr %s217, 8
        %s219 = scalar_lea.vmem %s1, %s218
        %p220 = pneg %p80
        %p221 = pneg %p77
        %s222 = smul.u32 2, %s22
        %p223 = scmp.lt.s32.totalorder %s21, 1
        %s224 = scalar_select %p223, %s21, 1
        %p225 = scmp.lt.s32.totalorder %s222, 1
        %s226 = scalar_select %p225, %s222, 1
        %s227 = smul.addr %s224, 2
        %s228 = sadd.s32 %s226, %s227
        %s229 = scalar_lea.vmem %s2, %s228
        %p230 = pneg %p108
        %p231 = pneg %p105
        %p232 = pneg %p136
        %p233 = pneg %p133
        %s234 = sand.u32 %s123, 1
        %s235 = scalar_lea.sflag [#allocation3], %s234
        %s236 = sand.u32 %s123, 1
        %s237 = smul.addr %s236, 2
        %s238 = scalar_lea.vmem [#allocation2], %s237
        %s239 = smul.u32 2, %s22
        %p240 = scmp.lt.s32.totalorder %s21, 1
        %s241 = scalar_select %p240, %s21, 1
        %p242 = scmp.lt.s32.totalorder %s239, 1
        %s243 = scalar_select %p242, %s239, 1
        %s244 = smul.addr %s241, 4
        %s245 = sadd.s32 %s243, %s244
        %s246 = smul.addr %s245, 8
        %s247 = scalar_lea.vmem %s0, %s246
        %s248 = smul.u32 2, %s22
        %s249 = smul.u32 2, %s22
        %p250 = scmp.lt.s32.totalorder %s21, 1
        %s251 = scalar_select %p250, %s21, 1
        %p252 = scmp.lt.s32.totalorder %s249, 1
        %s253 = scalar_select %p252, %s249, 1
        %s254 = smul.addr %s251, 4
        %s255 = sadd.s32 %s253, %s254
        %s256 = smul.addr %s255, 8
        %s257 = scalar_lea.vmem %s1, %s256
        %s258 = smul.u32 2, %s22
        %s259 = smul.u32 2, %s22
        %p260 = scmp.lt.s32.totalorder %s21, 1
        %s261 = scalar_select %p260, %s21, 1
        %p262 = scmp.lt.s32.totalorder %s259, 1
        %s263 = scalar_select %p262, %s259, 1
        %s264 = smul.addr %s261, 2
        %s265 = sadd.s32 %s263, %s264
        %s266 = scalar_lea.vmem %s2, %s265
        %s267 = smul.u32 2, %s22
        %s268 = smul.u32 2, %s22
        %v269 = vld [vmem:[%s266] sm:$0x3]
        %v270 = vld [vmem:[%s247] sm:$0xff]
        %v271 = vld [vmem:[%s247 + $0x8] sm:$0xff]
        %v272 = vld [vmem:[%s247 + $0x10] sm:$0x1]
        %v273 = vld [vmem:[%s247 + $0x18] sm:$0x1]
        %vm274 = vcmask 1040384
        %v275 = vsel %vm274, %v272, -inf
        %v276 = vmax.f32 %v270, %v275
        %v277 = vrot.slane %v276, 4
        %v278 = vmax.f32 %v276, %v277
        %v279 = vrot.slane %v278, 2
        %v280 = vmax.f32 %v278, %v279
        %v281 = vrot.slane %v280, 1
        %v282 = vmax.f32 %v280, %v281
        %v283 = vsel %vm274, %v273, -inf
        %v284 = vmax.f32 %v271, %v283
        %v285 = vrot.slane %v284, 4
        %v286 = vmax.f32 %v284, %v285
        %v287 = vrot.slane %v286, 2
        %v288 = vmax.f32 %v286, %v287
        %v289 = vrot.slane %v288, 1
        %v290 = vmax.f32 %v288, %v289
        %v291 = vsub.f32 %v270, %v282
        %v292 = vsub.f32 %v271, %v290
        %v293 = vsub.f32 %v272, %v282
        %v294 = vsub.f32 %v273, %v290
        %v295 = vmul.f32 %v291, 1.442695
        %v296 = vpow.pop %v295
        %v297 = vmul.f32 %v292, 1.442695
        %v298 = vpow.pop %v297
        %v299 = vmul.f32 %v293, 1.442695
        %v300 = vpow.pop %v299
        %v301 = vmul.f32 %v294, 1.442695
        %v302 = vpow.pop %v301
        %v303 = vsel %vm274, %v300, 0.0
        %v304 = vadd.f32 %v296, %v303
        %v305 = vrot.slane %v304, 4
        %v306 = vadd.f32 %v304, %v305
        %v307 = vrot.slane %v306, 2
        %v308 = vadd.f32 %v306, %v307
        %v309 = vrot.slane %v308, 1
        %v310 = vadd.f32 %v308, %v309
        %v311 = vsel %vm274, %v302, 0.0
        %v312 = vadd.f32 %v298, %v311
        %v313 = vrot.slane %v312, 4
        %v314 = vadd.f32 %v312, %v313
        %v315 = vrot.slane %v314, 2
        %v316 = vadd.f32 %v314, %v315
        %v317 = vrot.slane %v316, 1
        %v318 = vadd.f32 %v316, %v317
        %v319 = vlog2.pop %v310
        %v320 = vmul.f32 %v319, 0.6931472
        %v321 = vlog2.pop %v318
        %v322 = vmul.f32 %v321, 0.6931472
        %v323 = vlaneseq
        %v324 = vshrl.u32 %v323, 7
        %v325 = vadd.s32 %v324, 8
        %v326 = vlaneseq
        %v327 = vshrl.u32 %v326, 7
        %v328 = vsub.s32 0, %v327
        %v329 = vrot.slane %v269, %v328
        %v330 = vlaneseq
        %v331 = vshrl.u32 %v330, 7
        %v332 = vsub.s32 1, %v331
        %v333 = vrot.slane %v269, %v332
        %vm334 = vcmp.eq.s32.totalorder %v324, %v329
        %vm335 = vcmp.eq.s32.totalorder %v324, %v333
        %vm336 = vcmp.eq.s32.totalorder %v325, %v329
        %vm337 = vcmp.eq.s32.totalorder %v325, %v333
        %v338 = vsel %vm334, %v291, 0.0
        %v339 = vsel %vm335, %v292, 0.0
        %v340 = vsel %vm336, %v293, 0.0
        %v341 = vsel %vm337, %v294, 0.0
        %v342 = vsel %vm274, %v340, 0.0
        %v343 = vadd.f32 %v338, %v342
        %v344 = vrot.slane %v343, 4
        %v345 = vadd.f32 %v343, %v344
        %v346 = vrot.slane %v345, 2
        %v347 = vadd.f32 %v345, %v346
        %v348 = vrot.slane %v347, 1
        %v349 = vadd.f32 %v347, %v348
        %v350 = vsel %vm274, %v341, 0.0
        %v351 = vadd.f32 %v339, %v350
        %v352 = vrot.slane %v351, 4
        %v353 = vadd.f32 %v351, %v352
        %v354 = vrot.slane %v353, 2
        %v355 = vadd.f32 %v353, %v354
        %v356 = vrot.slane %v355, 1
        %v357 = vadd.f32 %v355, %v356
        %v358 = vsub.f32 %v320, %v349
        %v359 = vsub.f32 %v322, %v357
        %v360 = vmul.f32 %v358, 0.4
        %v361 = vmul.f32 %v359, 0.4
        %v362 = vld [vmem:[%s257] sm:$0xff]
        %v363 = vld [vmem:[%s257 + $0x8] sm:$0xff]
        %v364 = vld [vmem:[%s257 + $0x10] sm:$0x1]
        %v365 = vld [vmem:[%s257 + $0x18] sm:$0x1]
        %v366 = vsel %vm274, %v364, -inf
        %v367 = vmax.f32 %v362, %v366
        %v368 = vrot.slane %v367, 4
        %v369 = vmax.f32 %v367, %v368
        %v370 = vrot.slane %v369, 2
        %v371 = vmax.f32 %v369, %v370
        %v372 = vrot.slane %v371, 1
        %v373 = vmax.f32 %v371, %v372
        %v374 = vsel %vm274, %v365, -inf
        %v375 = vmax.f32 %v363, %v374
        %v376 = vrot.slane %v375, 4
        %v377 = vmax.f32 %v375, %v376
        %v378 = vrot.slane %v377, 2
        %v379 = vmax.f32 %v377, %v378
        %v380 = vrot.slane %v379, 1
        %v381 = vmax.f32 %v379, %v380
        %v382 = vsub.f32 %v362, %v373
        %v383 = vsub.f32 %v363, %v381
        %v384 = vsub.f32 %v364, %v373
        %v385 = vsub.f32 %v365, %v381
        %v386 = vmul.f32 %v382, 1.442695
        %v387 = vpow.pop %v386
        %v388 = vmul.f32 %v383, 1.442695
        %v389 = vpow.pop %v388
        %v390 = vmul.f32 %v384, 1.442695
        %v391 = vpow.pop %v390
        %v392 = vmul.f32 %v385, 1.442695
        %v393 = vpow.pop %v392
        %v394 = vsel %vm274, %v391, 0.0
        %v395 = vadd.f32 %v387, %v394
        %v396 = vrot.slane %v395, 4
        %v397 = vadd.f32 %v395, %v396
        %v398 = vrot.slane %v397, 2
        %v399 = vadd.f32 %v397, %v398
        %v400 = vrot.slane %v399, 1
        %v401 = vadd.f32 %v399, %v400
        %v402 = vsel %vm274, %v393, 0.0
        %v403 = vadd.f32 %v389, %v402
        %v404 = vrot.slane %v403, 4
        %v405 = vadd.f32 %v403, %v404
        %v406 = vrot.slane %v405, 2
        %v407 = vadd.f32 %v405, %v406
        %v408 = vrot.slane %v407, 1
        %v409 = vadd.f32 %v407, %v408
        %v410 = vlog2.pop %v401
        %v411 = vmul.f32 %v410, 0.6931472
        %v412 = vlog2.pop %v409
        %v413 = vmul.f32 %v412, 0.6931472
        %v414 = vsel %vm334, %v382, 0.0
        %v415 = vsel %vm335, %v383, 0.0
        %v416 = vsel %vm336, %v384, 0.0
        %v417 = vsel %vm337, %v385, 0.0
        %v418 = vsel %vm274, %v416, 0.0
        %v419 = vadd.f32 %v414, %v418
        %v420 = vrot.slane %v419, 4
        %v421 = vadd.f32 %v419, %v420
        %v422 = vrot.slane %v421, 2
        %v423 = vadd.f32 %v421, %v422
        %v424 = vrot.slane %v423, 1
        %v425 = vadd.f32 %v423, %v424
        %v426 = vsel %vm274, %v417, 0.0
        %v427 = vadd.f32 %v415, %v426
        %v428 = vrot.slane %v427, 4
        %v429 = vadd.f32 %v427, %v428
        %v430 = vrot.slane %v429, 2
        %v431 = vadd.f32 %v429, %v430
        %v432 = vrot.slane %v431, 1
        %v433 = vadd.f32 %v431, %v432
        %v434 = vsub.f32 %v411, %v425
        %v435 = vsub.f32 %v413, %v433
        %v436 = vadd.f32 %v360, %v434
        %v437 = vadd.f32 %v361, %v435
        %v440 = vcombine.low %v436, %v437
        %v442 = vunpack.c.l.s4 1966171168
        %v443 = vunpack.c.0.s8 %v442
        %v444 = vlaneseq
        %v445 = vshrl.u32 %v444, 7
        %v446 = vsub.s32 %v443, %v445
        %v447 = vrot.slane %v440, %v446
        %v449 = vunpack.c.l.s4 1966171168
        %v450 = vunpack.c.0.s8 %v449
        %v451 = vlaneseq
        %v452 = vshrl.u32 %v451, 7
        %v453 = vsub.s32 %v450, %v452
        %v454 = vrot.slane %v447, %v453
        %v456 = vlaneseq
        %vm457 = vcmp.ge.s32.totalorder %v456, 0
        %vm458 = vcmp.lt.s32.totalorder %v456, 256
        %vm459 = vmand %vm457, %vm458
        %460 = vst.msk [vmem:[%s238] sm:$0x3] %vm459, %v454
        %s461 = sand.u32 %s123, 1
        %s462 = scalar_lea.sflag [#allocation3], %s461
        %s463 = sand.u32 %s123, 1
        %s464 = smul.addr %s463, 2
        %s465 = scalar_lea.vmem [#allocation2], %s464
        // Predicated region
        $region33: #{tpu_custom_call.1} parent=31 // pred_check
          %p466 = pneg %p133
        $region34: #{tpu_custom_call.1} parent=31 // pred_check_branch
          %468 = sbr.rel (%p466) target = $region36
        $region35: #{tpu_custom_call.1} parent=31 // pred_region
          %s469 = smul.u32 2, %s22
          %s471 = ssub.s32 32, 32
          %472 = vsyncadd %s462, %s471
          %s473 = smul.addr %s21, 2
          %s474 = sadd.s32 %s469, %s473
          %s475 = smul.addr %s474, 16
          %s476 = scalar_lea.hbm %s3, %s475
          %s478 = sshll.u32 %s465, 4
          %s479 = int_to_ptr.vmem [resolvable:$true] %s478
          %481 = dma.vmem_to_hbm [thread:$0]  %s479, 32, %s476, %s462
        $region36: #{tpu_custom_call.1} parent=31 // pred_fallthru
          _
      $region32: #{tpu_custom_call.1} parent=5 // pred_fallthru
        _
      %p482 = scmp.le.s32.totalorder 2, %s12
      // Predicated region
      $region37: #{tpu_custom_call.1} parent=5 // pred_check
        %p483 = pneg %p482
      $region38: #{tpu_custom_call.1} parent=5 // pred_check_branch
        %485 = sbr.rel (%p483) target = $region40
      $region39: #{tpu_custom_call.1} parent=5 // pred_region
        %s486 = ssub.s32 %s12, 2
        // Predicated region
        $region41: #{tpu_custom_call.1} parent=39 // pred_check
          %p487 = pneg %p139
        $region42: #{tpu_custom_call.1} parent=39 // pred_check_branch
          %489 = sbr.rel (%p487) target = $region44
        $region43: #{tpu_custom_call.1} parent=39 // pred_region
          %s490 = sand.u32 %s124, 1
          %s491 = scalar_lea.sflag [#allocation3], %s490
          %s492 = sand.u32 %s124, 1
          %s493 = smul.addr %s492, 2
          %s494 = scalar_lea.vmem [#allocation2], %s493
          %495 = dma.done %s491, 32
        $region44: #{tpu_custom_call.1} parent=39 // pred_fallthru
          _
      $region40: #{tpu_custom_call.1} parent=5 // pred_fallthru
        _
    $region6: #{tpu_custom_call.1} parent=1 // loop_footer
      %s16 = sadd.s32 1, %s12
    $region7: #{tpu_custom_call.1} parent=1 // loop_footer_branch
      %11 = sbr.rel target = $region3
    $region8: #{tpu_custom_call.1} parent=1 // loop_exit
      _
    %496 = vsyncpa [#allocation3], 1
    %s497 = scalar_lea.sflag [#allocation3], 1
    %498 = vsyncpa %s497, 1

</llo_original>
